<compile_context>
chip_gen: v7x
topology: tpu7x:2x2x1
jax: 0.10.0
libtpu: 0.0.40
codegen_flags: <defaults>
</compile_context>

<pallas_src>
import jax
import jax.numpy as jnp
from jax.experimental import pallas as pl
from jax.experimental.pallas import tpu as pltpu

EPSILON = 1e-8
_LANES = 128
_TARGET_ROW_TILE = 2048  # 2048 x 128 x 4B = 1 MiB per input per grid step


def _smape_sum_kernel(yp_ref, yt_ref, out_ref, acc_ref):
    # acc_ref: (1, 128) f32 lane-wise partial sums, persistent across the grid.
    @pl.when(pl.program_id(0) == 0)
    def _():
        acc_ref[...] = jnp.zeros_like(acc_ref)

    yp = yp_ref[...].astype(jnp.float32)
    yt = yt_ref[...].astype(jnp.float32)
    denominator = (jnp.abs(yt) + jnp.abs(yp)) * 0.5 + EPSILON
    diff = jnp.abs(yt - yp) / denominator
    # Sublane-only reduction (axis 0); keeps 128 per-lane accumulators.
    acc_ref[...] += jnp.sum(diff, axis=0, keepdims=True)

    @pl.when(pl.program_id(0) == pl.num_programs(0) - 1)
    def _():
        # Single cross-lane reduce + scalar store, only once.
        out_ref[...] = jnp.sum(acc_ref[...], keepdims=True)


def _round_up(x, m):
    return ((x + m - 1) // m) * m


def smape_loss(y_pred, y_true):
    """SMAPE loss, semantics identical to the PyTorch SMAPELoss.forward."""
    assert y_pred.shape == y_true.shape
    n_elems = y_pred.size

    yp = y_pred.reshape(-1)
    yt = y_true.reshape(-1)

    # Choose the row tile: as large as possible (amortize per-step overhead),
    # capped at the (8-row aligned) total number of 128-lane rows.
    rows = pl.cdiv(n_elems, _LANES)
    row_tile = min(_TARGET_ROW_TILE, _round_up(rows, 8))
    padded_rows = _round_up(rows, row_tile)
    padded_elems = padded_rows * _LANES

    # Pad only if the flattened size is ragged; for tile-aligned inputs this is
    # a free reshape (no extra HBM pass).  Zero padding contributes 0 to the
    # SMAPE sum, so correctness is preserved.
    # TODO(synk): for ragged sizes an in-kernel iota mask + scalar-prefetched
    # element count would avoid the pad copy entirely.
    if padded_elems != n_elems:
        yp = jnp.pad(yp, (0, padded_elems - n_elems))
        yt = jnp.pad(yt, (0, padded_elems - n_elems))
    yp = yp.reshape(padded_rows, _LANES)
    yt = yt.reshape(padded_rows, _LANES)

    grid = (padded_rows // row_tile,)

    total = pl.pallas_call(
        _smape_sum_kernel,
        out_shape=jax.ShapeDtypeStruct((1, 1), jnp.float32),
        grid_spec=pltpu.PrefetchScalarGridSpec(
            num_scalar_prefetch=0,
            grid=grid,
            in_specs=[
                pl.BlockSpec((row_tile, _LANES), lambda i: (i, 0)),
                pl.BlockSpec((row_tile, _LANES), lambda i: (i, 0)),
            ],
            out_specs=pl.BlockSpec((1, 1), lambda i: (0, 0)),
            scratch_shapes=[pltpu.VMEM((1, _LANES), jnp.float32)],
        ),
        compiler_params=pltpu.CompilerParams(
            dimension_semantics=("arbitrary",),
        ),
    )(yp, yt)

    return (total[0, 0] / jnp.float32(n_elems)) * jnp.float32(100.0)


def smape_ref(y_pred, y_true):
    denominator = (jnp.abs(y_true) + jnp.abs(y_pred)) / 2.0 + EPSILON
    diff = jnp.abs(y_true - y_pred) / denominator
    return jnp.mean(diff) * 100.0


if __name__ == "__main__":
    key = jax.random.PRNGKey(0)
    k1, k2 = jax.random.split(key)
    # Small forecast-like shapes: batch=8, horizon=32.
    y_pred = jax.random.normal(k1, (8, 32), dtype=jnp.float32)
    y_true = jax.random.normal(k2, (8, 32), dtype=jnp.float32)

    out = smape_loss(y_pred, y_true)
    jax.block_until_ready(out)

    ref = smape_ref(y_pred.astype(jnp.float32), y_true.astype(jnp.float32))
    assert jnp.allclose(out, ref, rtol=1e-5, atol=1e-4), (out, ref)
    print("KERNEL_OK")
</pallas_src>

<mosaic_0001>
module attributes {stable_mosaic.version = 11 : i64} {
  func.func @_smape_sum_kernel(%arg0: i32, %arg1: memref<8x128xf32, #tpu.memory_space<vmem>>, %arg2: memref<8x128xf32, #tpu.memory_space<vmem>>, %arg3: memref<1x1xf32, #tpu.memory_space<vmem>>, %arg4: memref<1x128xf32, #tpu.memory_space<vmem>>) attributes {dimension_semantics = [#tpu.dimension_semantics<arbitrary>], iteration_bounds = array<i64: 1>, scalar_prefetch = 0 : i64, scratch_operands = 1 : i64, tpu.core_type = #tpu.core_type<tc>, window_params = [{transform_indices = @transform_0, window_bounds = array<i64: 8, 128>}, {transform_indices = @transform_1, window_bounds = array<i64: 8, 128>}, {pipeline_mode = #tpu.pipeline_mode<synchronous>, transform_indices = @transform_2, window_bounds = array<i64: 1, 1>}]} {
    %c0_i32 = arith.constant 0 : i32
    %0 = arith.cmpi eq, %arg0, %c0_i32 : i32
    %1 = arith.extui %0 : i1 to i32
    %c0_i32_0 = arith.constant 0 : i32
    %2 = arith.cmpi ne, %1, %c0_i32_0 : i32
    scf.if %2 {
      %cst_12 = arith.constant 0.000000e+00 : f32
      %23 = vector.broadcast %cst_12 : f32 to vector<1x128xf32>
      %c0_13 = arith.constant 0 : index
      %c0_14 = arith.constant 0 : index
      %24 = vector.load %arg4[%c0_13, %c0_14] : memref<1x128xf32, #tpu.memory_space<vmem>>, vector<1x128xf32>
      tpu.vector_store %arg4[%c0_13, %c0_14], %23 {strides = array<i32>} : memref<1x128xf32, #tpu.memory_space<vmem>>, vector<1x128xf32>,
    } else {
    }
    %c0 = arith.constant 0 : index
    %c0_1 = arith.constant 0 : index
    %3 = vector.load %arg1[%c0, %c0_1] : memref<8x128xf32, #tpu.memory_space<vmem>>, vector<8x128xf32>
    %c0_2 = arith.constant 0 : index
    %c0_3 = arith.constant 0 : index
    %4 = vector.load %arg2[%c0_2, %c0_3] : memref<8x128xf32, #tpu.memory_space<vmem>>, vector<8x128xf32>
    %5 = math.absf %4 : vector<8x128xf32>
    %6 = math.absf %3 : vector<8x128xf32>
    %7 = arith.addf %5, %6 : vector<8x128xf32>
    %cst = arith.constant 5.000000e-01 : f32
    %8 = vector.broadcast %cst : f32 to vector<8x128xf32>
    %9 = arith.mulf %7, %8 : vector<8x128xf32>
    %cst_4 = arith.constant 9.99999993E-9 : f32
    %10 = vector.broadcast %cst_4 : f32 to vector<8x128xf32>
    %11 = arith.addf %9, %10 : vector<8x128xf32>
    %12 = arith.subf %4, %3 : vector<8x128xf32>
    %13 = math.absf %12 : vector<8x128xf32>
    %14 = arith.divf %13, %11 : vector<8x128xf32>
    %c0_5 = arith.constant 0 : index
    %c0_6 = arith.constant 0 : index
    %15 = vector.load %arg4[%c0_5, %c0_6] : memref<1x128xf32, #tpu.memory_space<vmem>>, vector<1x128xf32>
    %cst_7 = arith.constant dense<0.000000e+00> : vector<128xf32>
    %16 = vector.multi_reduction <add>, %14, %cst_7 [0] : vector<8x128xf32> to vector<128xf32>
    %17 = vector.shape_cast %16 : vector<128xf32> to vector<1x128xf32>
    %18 = arith.addf %15, %17 : vector<1x128xf32>
    %c0_8 = arith.constant 0 : index
    %c0_9 = arith.constant 0 : index
    %19 = vector.load %arg4[%c0_8, %c0_9] : memref<1x128xf32, #tpu.memory_space<vmem>>, vector<1x128xf32>
    tpu.vector_store %arg4[%c0_8, %c0_9], %18 {strides = array<i32>} : memref<1x128xf32, #tpu.memory_space<vmem>>, vector<1x128xf32>,
    %c0_i32_10 = arith.constant 0 : i32
    %20 = arith.cmpi eq, %arg0, %c0_i32_10 : i32
    %21 = arith.extui %20 : i1 to i32
    %c0_i32_11 = arith.constant 0 : i32
    %22 = arith.cmpi ne, %21, %c0_i32_11 : i32
    scf.if %22 {
      %c0_12 = arith.constant 0 : index
      %c0_13 = arith.constant 0 : index
      %23 = vector.load %arg4[%c0_12, %c0_13] : memref<1x128xf32, #tpu.memory_space<vmem>>, vector<1x128xf32>
      %24 = vector.shape_cast %23 : vector<1x128xf32> to vector<1x1x128xf32>
      %cst_14 = arith.constant dense<0.000000e+00> : vector<1xf32>
      %25 = vector.multi_reduction <add>, %24, %cst_14 [1, 2] : vector<1x1x128xf32> to vector<1xf32>
      %26 = vector.shape_cast %25 : vector<1xf32> to vector<1x1x1xf32>
      %27 = vector.extract %26[0, 0, 0] : f32 from vector<1x1x1xf32>
      %28 = vector.broadcast %27 : f32 to vector<1x1xf32>
      %c0_15 = arith.constant 0 : index
      %c0_16 = arith.constant 0 : index
      %29 = vector.load %arg3[%c0_15, %c0_16] : memref<1x1xf32, #tpu.memory_space<vmem>>, vector<1x1xf32>
      tpu.vector_store %arg3[%c0_15, %c0_16], %28 {strides = array<i32>} : memref<1x1xf32, #tpu.memory_space<vmem>>, vector<1x1xf32>,
    } else {
    }
    return
  }
  func.func @transform_0(%arg0: i32) -> (i32, i32) {
    %c0_i32 = arith.constant 0 : i32
    %c0_i32_0 = arith.constant 0 : i32
    return %arg0, %c0_i32 : i32, i32
  }
  func.func @transform_1(%arg0: i32) -> (i32, i32) {
    %c0_i32 = arith.constant 0 : i32
    %c0_i32_0 = arith.constant 0 : i32
    return %arg0, %c0_i32 : i32, i32
  }
  func.func @transform_2(%arg0: i32) -> (i32, i32) {
    %c0_i32 = arith.constant 0 : i32
    %c0_i32_0 = arith.constant 0 : i32
    %c0_i32_1 = arith.constant 0 : i32
    return %c0_i32, %c0_i32_0 : i32, i32
  }
}

</mosaic_0001>

<llo_original>
// kernel: tpu_custom_call.1
$region0: #{tpu_custom_call.1}
  #allocation0 [shape = 'u32[]', space=smem, size = 0x4, offset = 0x4, fixed_abs, tag = 'smem constant byte address 0x4 - core index']
  #allocation1 [shape = 'u32[144,128]{1,0:T(1,128)}', space=vmem, size = 0x12000, scoped, tag = 'internal scratch']
  #allocation2 [shape = 'f32[1,128]{1,0:T(1,128)}', space=vmem, size = 0x200, scoped, tag = 'scratch operand']
  %s0 = inlined_call_operand.hbm [shape: f32[8,128], index: 0, kind: input, shape index: {}]
  %s1 = inlined_call_operand.hbm [shape: f32[8,128], index: 1, kind: input, shape index: {}]
  %s2 = inlined_call_operand.hbm [shape: f32[1,1], index: 2, kind: output, shape index: {}]
  %s3 = sld [smem:[#allocation0]]
  $region34: #{tpu_custom_call.1} parent=0
    _
  %s5 = ssub.s32 1, %s3
  %s6 = scalar_select 0, %s5, %s3
  $region1: #{tpu_custom_call.1} parent=0
    #allocation3 [shape = 'u8[4096]{0}', space=vmem, size = 0x1000, scoped, tag = 'input window, operand 0, single buffered']
    #allocation4 [shape = 's32[1]{0}', space=sflag, size = 0x4, scoped, tag = 'scoped memory for tpu_custom_call.1']
    #allocation5 [shape = 's32[1]{0}', space=sflag, size = 0x4, scoped, tag = 'scoped memory for tpu_custom_call.1']
    #allocation6 [shape = 'u8[4096]{0}', space=vmem, size = 0x1000, scoped, tag = 'input window, operand 1, single buffered']
    #allocation7 [shape = 's32[1]{0}', space=sflag, size = 0x4, scoped, tag = 'scoped memory for tpu_custom_call.1']
    #allocation8 [shape = 'u8[512]{0}', space=vmem, size = 0x400, scoped, tag = 'output window, operand 0, single buffered']
    %7 = vsyncpa [#allocation4], 0
    %8 = vsyncpa [#allocation7], 0
    %9 = vsyncpa [#allocation5], 0
    // Predicated region
    $region2: #{tpu_custom_call.1} parent=1 // pred_check
      _
    $region3: #{tpu_custom_call.1} parent=1 // pred_check_branch
      %11 = sbr.rel (0) target = $region5
    $region4: #{tpu_custom_call.1} parent=1 // pred_region
      %s13 = ssub.s32 128, 128
      %14 = vsyncadd [#allocation4], %s13
      %s16 = sshll.u32 [#allocation3], 4
      %s17 = int_to_ptr.vmem [resolvable:$true] %s16
      %19 = dma.hbm_to_vmem [thread:$0]  %s0, 128, %s17, [#allocation4]
    $region5: #{tpu_custom_call.1} parent=1 // pred_fallthru
      _
    // Predicated region
    $region6: #{tpu_custom_call.1} parent=1 // pred_check
      _
    $region7: #{tpu_custom_call.1} parent=1 // pred_check_branch
      %21 = sbr.rel (0) target = $region9
    $region8: #{tpu_custom_call.1} parent=1 // pred_region
      %s23 = ssub.s32 128, 128
      %24 = vsyncadd [#allocation7], %s23
      %s26 = sshll.u32 [#allocation6], 4
      %s27 = int_to_ptr.vmem [resolvable:$true] %s26
      %29 = dma.hbm_to_vmem [thread:$0]  %s1, 128, %s27, [#allocation7]
    $region9: #{tpu_custom_call.1} parent=1 // pred_fallthru
      _
    // Predicated region
    $region10: #{tpu_custom_call.1} parent=1 // pred_check
      _
    $region11: #{tpu_custom_call.1} parent=1 // pred_check_branch
      %31 = sbr.rel (0) target = $region13
    $region12: #{tpu_custom_call.1} parent=1 // pred_region
      %32 = dma.done [#allocation4], 128
    $region13: #{tpu_custom_call.1} parent=1 // pred_fallthru
      _
    // Predicated region
    $region14: #{tpu_custom_call.1} parent=1 // pred_check
      _
    $region15: #{tpu_custom_call.1} parent=1 // pred_check_branch
      %34 = sbr.rel (0) target = $region17
    $region16: #{tpu_custom_call.1} parent=1 // pred_region
      %35 = dma.done [#allocation7], 128
    $region17: #{tpu_custom_call.1} parent=1 // pred_fallthru
      _
    %p36 = scmp.eq.s32.totalorder 0, 0
    // Predicated region
    $region18: #{tpu_custom_call.1} parent=1 // pred_check
      %p37 = pneg %p36
    $region19: #{tpu_custom_call.1} parent=1 // pred_check_branch
      %39 = sbr.rel (%p37) target = $region21
    $region20: #{tpu_custom_call.1} parent=1 // pred_region
      %40 = vst [vmem:[#allocation2] sm:$0x1] 0.0
    $region21: #{tpu_custom_call.1} parent=1 // pred_fallthru
      _
    %v41 = vld [vmem:[#allocation3] sm:$0xff]
    %v42 = vld [vmem:[#allocation6] sm:$0xff]
    %v43 = vand.u32 2147483647, %v42
    %v44 = vand.u32 2147483647, %v41
    %v45 = vadd.f32 %v43, %v44
    %v46 = vmul.f32 %v45, 0.5
    %v47 = vadd.f32 %v46, 1e-08
    %v48 = vsub.f32 %v42, %v41
    %v49 = vand.u32 2147483647, %v48
    %v50 = vrcp.pop %v47
    %v51 = vmul.f32 %v49, %v50
    %v52 = vld [vmem:[#allocation2] sm:$0x1]
    %v53 = vrot.slane %v51, 4
    %v54 = vadd.f32 %v51, %v53
    %v55 = vrot.slane %v54, 2
    %v56 = vadd.f32 %v54, %v55
    %v57 = vrot.slane %v56, 1
    %v58 = vadd.f32 %v56, %v57
    %v59 = vadd.f32 %v52, %v58
    %60 = vst [vmem:[#allocation2] sm:$0x1] %v59
    // Predicated region
    $region22: #{tpu_custom_call.1} parent=1 // pred_check
      %p61 = pneg %p36
    $region23: #{tpu_custom_call.1} parent=1 // pred_check_branch
      %63 = sbr.rel (%p61) target = $region25
    $region24: #{tpu_custom_call.1} parent=1 // pred_region
      %v64 = vld [vmem:[#allocation2] sm:$0x1]
      %vm65 = vcmask 1040384
      %v66 = vsel %vm65, %v64, 0.0
      %67 = vadd.xlane.f32.xlu0 %v66
      %v68 = vpop.xlane.xlu0 %67
      %v69 = vrot.slane %v68, 4
      %v70 = vadd.f32 %v68, %v69
      %v71 = vrot.slane %v70, 2
      %v72 = vadd.f32 %v70, %v71
      %v73 = vrot.slane %v72, 1
      %v74 = vadd.f32 %v72, %v73
      %s75 = vtos %v74
      %v76 = vstv %s75
      %vm77 = vcmask 0
      %78 = vst.msk [vmem:[#allocation8] sm:$0x1] %vm77, %v76
    $region25: #{tpu_custom_call.1} parent=1 // pred_fallthru
      _
    // Predicated region
    $region26: #{tpu_custom_call.1} parent=1 // pred_check
      _
    $region27: #{tpu_custom_call.1} parent=1 // pred_check_branch
      %80 = sbr.rel (0) target = $region29
    $region28: #{tpu_custom_call.1} parent=1 // pred_region
      %s82 = ssub.s32 16, 16
      %83 = vsyncadd [#allocation5], %s82
      %s85 = sshll.u32 [#allocation8], 4
      %s86 = int_to_ptr.vmem [resolvable:$true] %s85
      %88 = dma.vmem_to_hbm [thread:$0]  %s86, 16, %s2, [#allocation5]
    $region29: #{tpu_custom_call.1} parent=1 // pred_fallthru
      _
    // Predicated region
    $region30: #{tpu_custom_call.1} parent=1 // pred_check
      _
    $region31: #{tpu_custom_call.1} parent=1 // pred_check_branch
      %90 = sbr.rel (0) target = $region33
    $region32: #{tpu_custom_call.1} parent=1 // pred_region
      %91 = dma.done [#allocation5], 16
    $region33: #{tpu_custom_call.1} parent=1 // pred_fallthru
      _
    %92 = vsyncpa [#allocation4], 1
    %93 = vsyncpa [#allocation7], 1
    %94 = vsyncpa [#allocation5], 1

</llo_original>
